<compile_context>
chip_gen: v7x
topology: tpu7x:2x2x1
jax: 0.10.0
libtpu: 0.0.40
codegen_flags: <defaults>
</compile_context>

<pallas_src>
import jax
import jax.numpy as jnp
from jax.experimental import pallas as pl
from jax.experimental.pallas import tpu as pltpu


def _softsign(x):
    return x / (1.0 + jnp.abs(x))


def _round_up(n, m):
    return ((n + m - 1) // m) * m


def stacked_fc_kernel(x_ref, w1_ref, b1_ref, w2_ref, b2_ref, o_ref):
    # Linear1: bf16 MXU inputs, f32 accumulation; bias add in f32.
    x = x_ref[...].astype(jnp.bfloat16)
    h = jnp.dot(x, w1_ref[...], preferred_element_type=jnp.float32) + b1_ref[...]

    # softsign after Linear1 followed by softsign after Dropout (identity in eval),
    # fused algebraically: softsign(softsign(h)) == h / (1 + 2*|h|).
    # The divide goes to the EUP as an approximate reciprocal (free slot);
    # only abs/mul stay on the VALU.
    h = h * pl.reciprocal(1.0 + 2.0 * jnp.abs(h), approx=True)

    # Linear2: cast the activated f32 intermediate to bf16 only at the MXU input.
    y = jnp.dot(h.astype(jnp.bfloat16), w2_ref[...],
                preferred_element_type=jnp.float32) + b2_ref[...]

    # Final softsign (EUP approximate reciprocal again), store in output dtype.
    o_ref[...] = (y * pl.reciprocal(1.0 + jnp.abs(y), approx=True)).astype(o_ref.dtype)


def prepare_params(w1, b1, w2, b2):
    """One-time parameter prep (call at init, NOT per forward call).

    Weights must already be (in, out). Casts weights to bf16 for the MXU
    (f32 accumulation happens in-kernel); biases stay f32, shaped (1, D).
    """
    return (w1.astype(jnp.bfloat16),
            b1.reshape(1, -1).astype(jnp.float32),
            w2.astype(jnp.bfloat16),
            b2.reshape(1, -1).astype(jnp.float32))


def stacked_fully_connected(x, w1b, b1, w2b, b2, *, tile_b=2048, out_dtype=None):
    """x: (B, D0); w1b: (D0, D1) bf16; b1: (1, D1) f32; w2b: (D1, D2) bf16; b2: (1, D2) f32.

    1-D grid over the batch. No wrapper-side padding: grid = cdiv(B, tb) and the
    ragged last block is masked by Pallas on writeback. Per-row VMEM footprint is
    ~3.75 KiB (x/out double-buffers + f32 intermediate + bf16 copies), so tb=8192
    stays around ~31 MiB — within the explicit 48 MiB VMEM limit and v7x's 64 MiB.
    """
    B, D0 = x.shape
    D1 = w1b.shape[1]
    D2 = w2b.shape[1]
    out_dtype = x.dtype if out_dtype is None else out_dtype

    # Batch tile: multiple of 8 (f32 sublanes), no larger than the batch,
    # capped so the VMEM footprint stays well under v7x's 64 MiB.
    tb = _round_up(min(tile_b, B), 8)
    tb = min(tb, 8192)
    # Keep >= 2 grid steps for large batches so v7x's two TensorCores both get work.
    if B >= 2048 and pl.cdiv(B, tb) < 2:
        tb = _round_up(pl.cdiv(B, 2), 8)

    grid = (pl.cdiv(B, tb),)

    out = pl.pallas_call(
        stacked_fc_kernel,
        out_shape=jax.ShapeDtypeStruct((B, D2), out_dtype),
        grid=grid,
        in_specs=[
            # x: tiled over batch; on v5e with small tiles consider
            # pipeline_mode=pl.Buffered(3) here — moot at large tile_b.
            pl.BlockSpec((tb, D0), lambda i: (i, 0)),
            pl.BlockSpec((D0, D1), lambda i: (0, 0)),   # w1: VMEM-resident
            pl.BlockSpec((1, D1), lambda i: (0, 0)),    # b1: VMEM-resident
            pl.BlockSpec((D1, D2), lambda i: (0, 0)),   # w2: VMEM-resident
            pl.BlockSpec((1, D2), lambda i: (0, 0)),    # b2: VMEM-resident
        ],
        out_specs=pl.BlockSpec((tb, D2), lambda i: (i, 0)),
        compiler_params=pltpu.CompilerParams(
            dimension_semantics=("parallel",),          # v7x megacore sharding
            vmem_limit_bytes=48 * 1024 * 1024,          # above 16/32 MiB defaults, < v7x 64 MiB
        ),
    )(x, w1b, b1, w2b, b2)

    return out


def reference(x, w1, b1, w2, b2):
    h = _softsign(x @ w1 + b1)
    h = _softsign(h)                      # dropout (eval) -> softsign
    return _softsign(h @ w2 + b2)


if __name__ == "__main__":
    # Small, TPU-friendly sizes consistent with the module structure.
    FC_LIST = [128, 256, 128]
    B = 200   # deliberately NOT a multiple of the tile: exercises the ragged last block

    key = jax.random.PRNGKey(0)
    kx, kw1, kb1, kw2, kb2 = jax.random.split(key, 5)

    x = jax.random.normal(kx, (B, FC_LIST[0]), dtype=jnp.float32)

    # Deterministic parameter init (uniform, roughly matching nn.Linear scale).
    lim1 = 1.0 / (FC_LIST[0] ** 0.5)
    w1 = jax.random.uniform(kw1, (FC_LIST[0], FC_LIST[1]), jnp.float32, -lim1, lim1)
    b1 = jax.random.uniform(kb1, (1, FC_LIST[1]), jnp.float32, -lim1, lim1)

    lim2 = 1.0 / (FC_LIST[1] ** 0.5)
    w2 = jax.random.uniform(kw2, (FC_LIST[1], FC_LIST[2]), jnp.float32, -lim2, lim2)
    b2 = jax.random.uniform(kb2, (1, FC_LIST[2]), jnp.float32, -lim2, lim2)

    # One-time parameter prep (bf16 weights, f32 (1,D) biases).
    w1b, b1p, w2b, b2p = prepare_params(w1, b1, w2, b2)

    # Small tile for the demo so the grid has several pipelined steps and a
    # ragged tail (200 = 3*64 + 8); production default is tile_b=2048.
    out = stacked_fully_connected(x, w1b, b1p, w2b, b2p, tile_b=64)
    out = jax.block_until_ready(out)

    ref = reference(x, w1, b1, w2, b2)
    assert out.shape == (B, FC_LIST[-1]), out.shape
    # bf16 MXU inputs (f32 accumulate) + EUP approx reciprocal vs. pure-f32
    # reference: outputs are bounded in (-1, 1) and the combined rounding error
    # is ~1e-3, so 2e-2 is ample.
    err = float(jnp.max(jnp.abs(out - ref)))
    assert jnp.allclose(out, ref, atol=2e-2, rtol=2e-2), f"mismatch vs reference: {err}"

    print("KERNEL_OK")
</pallas_src>

<mosaic_0001>
module attributes {stable_mosaic.version = 11 : i64} {
  func.func @stacked_fc_kernel(%arg0: i32, %arg1: memref<64x128xf32, #tpu.memory_space<vmem>>, %arg2: memref<128x256xbf16, #tpu.memory_space<vmem>>, %arg3: memref<1x256xf32, #tpu.memory_space<vmem>>, %arg4: memref<256x128xbf16, #tpu.memory_space<vmem>>, %arg5: memref<1x128xf32, #tpu.memory_space<vmem>>, %arg6: memref<64x128xf32, #tpu.memory_space<vmem>>) attributes {dimension_semantics = [#tpu.dimension_semantics<parallel>], iteration_bounds = array<i64: 4>, scalar_prefetch = 0 : i64, scratch_operands = 0 : i64, tpu.core_type = #tpu.core_type<tc>, window_params = [{transform_indices = @transform_0, window_bounds = array<i64: 64, 128>}, {pipeline_mode = #tpu.pipeline_mode<synchronous>, transform_indices = @transform_1, window_bounds = array<i64: 128, 256>}, {pipeline_mode = #tpu.pipeline_mode<synchronous>, transform_indices = @transform_2, window_bounds = array<i64: 1, 256>}, {pipeline_mode = #tpu.pipeline_mode<synchronous>, transform_indices = @transform_3, window_bounds = array<i64: 256, 128>}, {pipeline_mode = #tpu.pipeline_mode<synchronous>, transform_indices = @transform_4, window_bounds = array<i64: 1, 128>}, {transform_indices = @transform_5, window_bounds = array<i64: 64, 128>}]} {
    %c0 = arith.constant 0 : index
    %c0_0 = arith.constant 0 : index
    %0 = vector.load %arg1[%c0, %c0_0] : memref<64x128xf32, #tpu.memory_space<vmem>>, vector<64x128xf32>
    %1 = arith.truncf %0 : vector<64x128xf32> to vector<64x128xbf16>
    %c0_1 = arith.constant 0 : index
    %c0_2 = arith.constant 0 : index
    %2 = vector.load %arg2[%c0_1, %c0_2] : memref<128x256xbf16, #tpu.memory_space<vmem>>, vector<128x256xbf16>
    %cst = arith.constant dense<0.000000e+00> : vector<64x256xf32>
    %3 = tpu.matmul %1, %2, %cst {dimension_numbers = #tpu.dot_dimension_numbers<[1], [0], [0], [1], [0, 0, 1, 1], [], []>} : vector<64x128xbf16>, vector<128x256xbf16>, vector<64x256xf32> -> vector<64x256xf32>
    %c0_3 = arith.constant 0 : index
    %c0_4 = arith.constant 0 : index
    %4 = vector.load %arg3[%c0_3, %c0_4] : memref<1x256xf32, #tpu.memory_space<vmem>>, vector<1x256xf32>
    %5 = vector.broadcast %4 : vector<1x256xf32> to vector<64x256xf32>
    %6 = arith.addf %3, %5 : vector<64x256xf32>
    %7 = math.absf %6 : vector<64x256xf32>
    %cst_5 = arith.constant 2.000000e+00 : f32
    %8 = vector.broadcast %cst_5 : f32 to vector<64x256xf32>
    %9 = arith.mulf %8, %7 : vector<64x256xf32>
    %cst_6 = arith.constant 1.000000e+00 : f32
    %10 = vector.broadcast %cst_6 : f32 to vector<64x256xf32>
    %11 = arith.addf %10, %9 : vector<64x256xf32>
    %12 = tpu.reciprocal %11 {approx = true} : vector<64x256xf32> -> vector<64x256xf32>
    %13 = arith.mulf %6, %12 : vector<64x256xf32>
    %14 = arith.truncf %13 : vector<64x256xf32> to vector<64x256xbf16>
    %c0_7 = arith.constant 0 : index
    %c0_8 = arith.constant 0 : index
    %15 = vector.load %arg4[%c0_7, %c0_8] : memref<256x128xbf16, #tpu.memory_space<vmem>>, vector<256x128xbf16>
    %cst_9 = arith.constant dense<0.000000e+00> : vector<64x128xf32>
    %16 = tpu.matmul %14, %15, %cst_9 {dimension_numbers = #tpu.dot_dimension_numbers<[1], [0], [0], [1], [0, 0, 1, 1], [], []>} : vector<64x256xbf16>, vector<256x128xbf16>, vector<64x128xf32> -> vector<64x128xf32>
    %c0_10 = arith.constant 0 : index
    %c0_11 = arith.constant 0 : index
    %17 = vector.load %arg5[%c0_10, %c0_11] : memref<1x128xf32, #tpu.memory_space<vmem>>, vector<1x128xf32>
    %18 = vector.broadcast %17 : vector<1x128xf32> to vector<64x128xf32>
    %19 = arith.addf %16, %18 : vector<64x128xf32>
    %20 = math.absf %19 : vector<64x128xf32>
    %cst_12 = arith.constant 1.000000e+00 : f32
    %21 = vector.broadcast %cst_12 : f32 to vector<64x128xf32>
    %22 = arith.addf %21, %20 : vector<64x128xf32>
    %23 = tpu.reciprocal %22 {approx = true} : vector<64x128xf32> -> vector<64x128xf32>
    %24 = arith.mulf %19, %23 : vector<64x128xf32>
    %c0_13 = arith.constant 0 : index
    %c0_14 = arith.constant 0 : index
    %25 = vector.load %arg6[%c0_13, %c0_14] : memref<64x128xf32, #tpu.memory_space<vmem>>, vector<64x128xf32>
    tpu.vector_store %arg6[%c0_13, %c0_14], %24 {strides = array<i32>} : memref<64x128xf32, #tpu.memory_space<vmem>>, vector<64x128xf32>,
    return
  }
  func.func @transform_0(%arg0: i32) -> (i32, i32) {
    %c0_i32 = arith.constant 0 : i32
    %c0_i32_0 = arith.constant 0 : i32
    return %arg0, %c0_i32 : i32, i32
  }
  func.func @transform_1(%arg0: i32) -> (i32, i32) {
    %c0_i32 = arith.constant 0 : i32
    %c0_i32_0 = arith.constant 0 : i32
    %c0_i32_1 = arith.constant 0 : i32
    return %c0_i32, %c0_i32_0 : i32, i32
  }
  func.func @transform_2(%arg0: i32) -> (i32, i32) {
    %c0_i32 = arith.constant 0 : i32
    %c0_i32_0 = arith.constant 0 : i32
    %c0_i32_1 = arith.constant 0 : i32
    return %c0_i32, %c0_i32_0 : i32, i32
  }
  func.func @transform_3(%arg0: i32) -> (i32, i32) {
    %c0_i32 = arith.constant 0 : i32
    %c0_i32_0 = arith.constant 0 : i32
    %c0_i32_1 = arith.constant 0 : i32
    return %c0_i32, %c0_i32_0 : i32, i32
  }
  func.func @transform_4(%arg0: i32) -> (i32, i32) {
    %c0_i32 = arith.constant 0 : i32
    %c0_i32_0 = arith.constant 0 : i32
    %c0_i32_1 = arith.constant 0 : i32
    return %c0_i32, %c0_i32_0 : i32, i32
  }
  func.func @transform_5(%arg0: i32) -> (i32, i32) {
    %c0_i32 = arith.constant 0 : i32
    %c0_i32_0 = arith.constant 0 : i32
    return %arg0, %c0_i32 : i32, i32
  }
}

</mosaic_0001>

<llo_original>
// kernel: tpu_custom_call.1
$region0: #{tpu_custom_call.1}
  #allocation0 [shape = 'u32[]', space=smem, size = 0x4, offset = 0x4, fixed_abs, tag = 'smem constant byte address 0x4 - core index']
  #allocation1 [shape = 'u32[144,128]{1,0:T(1,128)}', space=vmem, size = 0x12000, scoped, tag = 'internal scratch']
  %s0 = inlined_call_operand.hbm [shape: f32[200,128], index: 0, kind: input, shape index: {}]
  %s1 = inlined_call_operand.hbm [shape: bf16[128,256], index: 1, kind: input, shape index: {}]
  %s2 = inlined_call_operand.vmem [shape: f32[1,256], index: 2, kind: input, shape index: {}]
  %s3 = inlined_call_operand.hbm [shape: bf16[256,128], index: 3, kind: input, shape index: {}]
  %s4 = inlined_call_operand.vmem [shape: f32[1,128], index: 4, kind: input, shape index: {}]
  %s5 = inlined_call_operand.hbm [shape: f32[200,128], index: 5, kind: output, shape index: {}]
  %s6 = sld [smem:[#allocation0]]
  $region65: #{tpu_custom_call.1} parent=0
    _
  %s8 = ssub.s32 1, %s6
  %s9 = scalar_select 0, %s8, %s6
  $region1: #{tpu_custom_call.1} parent=0
    #allocation2 [shape = 'u8[65536]{0}', space=vmem, size = 0x10000, scoped, tag = 'input window, operand 0']
    #allocation3 [shape = 's32[2]{0}', space=sflag, size = 0x8, scoped, tag = 'scoped memory for tpu_custom_call.1']
    #allocation4 [shape = 's32[2]{0}', space=sflag, size = 0x8, scoped, tag = 'scoped memory for tpu_custom_call.1']
    #allocation5 [shape = 'u8[65536]{0}', space=vmem, size = 0x10000, scoped, tag = 'input window, operand 1, single buffered']
    #allocation6 [shape = 's32[1]{0}', space=sflag, size = 0x4, scoped, tag = 'scoped memory for tpu_custom_call.1']
    #allocation7 [shape = 'u8[65536]{0}', space=vmem, size = 0x10000, scoped, tag = 'input window, operand 3, single buffered']
    #allocation8 [shape = 'u8[65536]{0}', space=vmem, size = 0x10000, scoped, tag = 'output window, operand 0']
    %10 = vsyncpa [#allocation3], 0
    %s11 = scalar_lea.sflag [#allocation3], 1
    %12 = vsyncpa %s11, 0
    %13 = vsyncpa [#allocation6], 0
    %14 = vsyncpa [#allocation4], 0
    %s15 = scalar_lea.sflag [#allocation4], 1
    %16 = vsyncpa %s15, 0
    loop: start=0, step=1, limit=6
    $region2: #{tpu_custom_call.1} parent=1 // loop_pre_header
      _
    $region3: #{tpu_custom_call.1} parent=1 // loop_header
      %s18 = sphi 0, %s22
      %p19 = scmp.ge.s32.totalorder %s18, 6
      %s28 = sphi 0, %s30
      %s31 = sphi 0, %s28
      %s32 = sphi 0, %s31
      %s48 = sphi 0, %s32
      %s52 = sphi 0, %s52
      %s54 = sphi 0, %s52
      %s55 = sphi 0, %s54
      %s69 = sphi 0, %s55
      %s73 = sphi 0, %s73
      %s75 = sphi 0, %s73
      %s76 = sphi 0, %s75
      %s90 = sphi 0, %s76
      %s94 = sphi 0, %s94
      %s96 = sphi 0, %s94
      %s97 = sphi 0, %s96
      %s111 = sphi 0, %s97
      %s115 = sphi 0, %s115
      %s117 = sphi 0, %s115
      %s118 = sphi 0, %s117
      %s132 = sphi 0, %s118
      %s138 = sphi 0, %s140
      %s141 = sphi 0, %s138
      %s142 = sphi 0, %s141
      %s158 = sphi 0, %s142
    $region4: #{tpu_custom_call.1} parent=1 // loop_header_branch
      %21 = sbr.rel (%p19) target = $region8
    $region5: #{tpu_custom_call.1} parent=1 // loop_body
      %s23 = ssub.s32 %s18, 1
      %s24 = ssub.s32 %s18, 2
      %s25 = sadd.s32 %s18, 1
      %s26 = ssub.s32 %s18, %s25
      %p27 = scmp.eq.s32.totalorder %s26, 0
      %s29 = sadd.s32 %s28, 1
      %s30 = scalar_select %p27, %s28, %s29
      %p33 = pneg %p27
      %p34 = scmp.eq.s32.totalorder %s18, 3
      %p35 = por %p33, %p34
      %p36 = scmp.ne.s32.totalorder %s28, %s31
      %p37 = scmp.eq.s32.totalorder %s18, 0
      %p38 = por %p36, %p37
      %p39 = scmp.ne.s32.totalorder %s28, %s31
      %p40 = scmp.eq.s32.totalorder %s23, 3
      %p41 = por %p39, %p40
      %p42 = scmp.ne.s32.totalorder %s31, %s32
      %p43 = scmp.eq.s32.totalorder %s23, 0
      %p44 = por %p42, %p43
      %p45 = scmp.ne.s32.totalorder %s31, %s32
      %p46 = scmp.eq.s32.totalorder %s24, 3
      %p47 = por %p45, %p46
      %p49 = scmp.ne.s32.totalorder %s32, %s48
      %p50 = scmp.eq.s32.totalorder %s24, 0
      %p51 = por %p49, %p50
      %s53 = sadd.s32 %s52, 1
      %p56 = scmp.eq.s32.totalorder %s18, 3
      %p57 = scmp.ne.s32.totalorder %s52, %s54
      %p58 = scmp.eq.s32.totalorder %s18, 0
      %p59 = por %p57, %p58
      %p60 = scmp.ne.s32.totalorder %s52, %s54
      %p61 = scmp.eq.s32.totalorder %s23, 3
      %p62 = por %p60, %p61
      %p63 = scmp.ne.s32.totalorder %s54, %s55
      %p64 = scmp.eq.s32.totalorder %s23, 0
      %p65 = por %p63, %p64
      %p66 = scmp.ne.s32.totalorder %s54, %s55
      %p67 = scmp.eq.s32.totalorder %s24, 3
      %p68 = por %p66, %p67
      %p70 = scmp.ne.s32.totalorder %s55, %s69
      %p71 = scmp.eq.s32.totalorder %s24, 0
      %p72 = por %p70, %p71
      %s74 = sadd.s32 %s73, 1
      %p77 = scmp.eq.s32.totalorder %s18, 3
      %p78 = scmp.ne.s32.totalorder %s73, %s75
      %p79 = scmp.eq.s32.totalorder %s18, 0
      %p80 = por %p78, %p79
      %p81 = scmp.ne.s32.totalorder %s73, %s75
      %p82 = scmp.eq.s32.totalorder %s23, 3
      %p83 = por %p81, %p82
      %p84 = scmp.ne.s32.totalorder %s75, %s76
      %p85 = scmp.eq.s32.totalorder %s23, 0
      %p86 = por %p84, %p85
      %p87 = scmp.ne.s32.totalorder %s75, %s76
      %p88 = scmp.eq.s32.totalorder %s24, 3
      %p89 = por %p87, %p88
      %p91 = scmp.ne.s32.totalorder %s76, %s90
      %p92 = scmp.eq.s32.totalorder %s24, 0
      %p93 = por %p91, %p92
      %s95 = sadd.s32 %s94, 1
      %p98 = scmp.eq.s32.totalorder %s18, 3
      %p99 = scmp.ne.s32.totalorder %s94, %s96
      %p100 = scmp.eq.s32.totalorder %s18, 0
      %p101 = por %p99, %p100
      %p102 = scmp.ne.s32.totalorder %s94, %s96
      %p103 = scmp.eq.s32.totalorder %s23, 3
      %p104 = por %p102, %p103
      %p105 = scmp.ne.s32.totalorder %s96, %s97
      %p106 = scmp.eq.s32.totalorder %s23, 0
      %p107 = por %p105, %p106
      %p108 = scmp.ne.s32.totalorder %s96, %s97
      %p109 = scmp.eq.s32.totalorder %s24, 3
      %p110 = por %p108, %p109
      %p112 = scmp.ne.s32.totalorder %s97, %s111
      %p113 = scmp.eq.s32.totalorder %s24, 0
      %p114 = por %p112, %p113
      %s116 = sadd.s32 %s115, 1
      %p119 = scmp.eq.s32.totalorder %s18, 3
      %p120 = scmp.ne.s32.totalorder %s115, %s117
      %p121 = scmp.eq.s32.totalorder %s18, 0
      %p122 = por %p120, %p121
      %p123 = scmp.ne.s32.totalorder %s115, %s117
      %p124 = scmp.eq.s32.totalorder %s23, 3
      %p125 = por %p123, %p124
      %p126 = scmp.ne.s32.totalorder %s117, %s118
      %p127 = scmp.eq.s32.totalorder %s23, 0
      %p128 = por %p126, %p127
      %p129 = scmp.ne.s32.totalorder %s117, %s118
      %p130 = scmp.eq.s32.totalorder %s24, 3
      %p131 = por %p129, %p130
      %p133 = scmp.ne.s32.totalorder %s118, %s132
      %p134 = scmp.eq.s32.totalorder %s24, 0
      %p135 = por %p133, %p134
      %s136 = ssub.s32 %s18, %s25
      %p137 = scmp.eq.s32.totalorder %s136, 0
      %s139 = sadd.s32 %s138, 1
      %s140 = scalar_select %p137, %s138, %s139
      %p143 = pneg %p137
      %p144 = scmp.eq.s32.totalorder %s18, 3
      %p145 = por %p143, %p144
      %p146 = scmp.ne.s32.totalorder %s138, %s141
      %p147 = scmp.eq.s32.totalorder %s18, 0
      %p148 = por %p146, %p147
      %p149 = scmp.ne.s32.totalorder %s138, %s141
      %p150 = scmp.eq.s32.totalorder %s23, 3
      %p151 = por %p149, %p150
      %p152 = scmp.ne.s32.totalorder %s141, %s142
      %p153 = scmp.eq.s32.totalorder %s23, 0
      %p154 = por %p152, %p153
      %p155 = scmp.ne.s32.totalorder %s141, %s142
      %p156 = scmp.eq.s32.totalorder %s24, 3
      %p157 = por %p155, %p156
      %p159 = scmp.ne.s32.totalorder %s142, %s158
      %p160 = scmp.eq.s32.totalorder %s24, 0
      %p161 = por %p159, %p160
      %p162 = scmp.le.s32.totalorder 1, %s18
      %p163 = scmp.lt.s32.totalorder %s18, 5
      %p164 = pnand %p162, %p163
      %p165 = pneg %p164
      // Predicated region
      $region9: #{tpu_custom_call.1} parent=5 // pred_check
        _
      $region10: #{tpu_custom_call.1} parent=5 // pred_check_branch
        %167 = sbr.rel (%p164) target = $region12
      $region11: #{tpu_custom_call.1} parent=5 // pred_region
        %s168 = ssub.s32 %s18, 1
        // Predicated region
        $region13: #{tpu_custom_call.1} parent=11 // pred_check
          %p169 = pneg %p65
        $region14: #{tpu_custom_call.1} parent=11 // pred_check_branch
          %171 = sbr.rel (%p169) target = $region16
        $region15: #{tpu_custom_call.1} parent=11 // pred_region
          %s173 = ssub.s32 2048, 2048
          %174 = vsyncadd [#allocation6], %s173
          %s175 = sshll.u32 [#allocation5], 4
          %s176 = int_to_ptr.vmem [resolvable:$true] %s175
          %181 = dma.hbm_to_vmem [thread:$0]  %s1, 2048, %s176, [#allocation6], 128, 128, 8
        $region16: #{tpu_custom_call.1} parent=11 // pred_fallthru
          _
        // Predicated region
        $region17: #{tpu_custom_call.1} parent=11 // pred_check
          %p182 = pneg %p86
        $region18: #{tpu_custom_call.1} parent=11 // pred_check_branch
          %184 = sbr.rel (%p182) target = $region20
        $region19: #{tpu_custom_call.1} parent=11 // pred_region
          _
        $region20: #{tpu_custom_call.1} parent=11 // pred_fallthru
          _
        // Predicated region
        $region21: #{tpu_custom_call.1} parent=11 // pred_check
          %p185 = pneg %p107
        $region22: #{tpu_custom_call.1} parent=11 // pred_check_branch
          %187 = sbr.rel (%p185) target = $region24
        $region23: #{tpu_custom_call.1} parent=11 // pred_region
          %s189 = ssub.s32 2048, 2048
          %190 = vsyncadd [#allocation6], %s189
          %s191 = sshll.u32 [#allocation7], 4
          %s192 = int_to_ptr.vmem [resolvable:$true] %s191
          %197 = dma.hbm_to_vmem [thread:$0]  %s3, 2048, %s192, [#allocation6], 64, 64, 4
        $region24: #{tpu_custom_call.1} parent=11 // pred_fallthru
          _
        // Predicated region
        $region25: #{tpu_custom_call.1} parent=11 // pred_check
          %p198 = pneg %p128
        $region26: #{tpu_custom_call.1} parent=11 // pred_check_branch
          %200 = sbr.rel (%p198) target = $region28
        $region27: #{tpu_custom_call.1} parent=11 // pred_region
          _
        $region28: #{tpu_custom_call.1} parent=11 // pred_fallthru
          _
      $region12: #{tpu_custom_call.1} parent=5 // pred_fallthru
        _
      %p201 = scmp.lt.s32.totalorder %s18, 4
      // Predicated region
      $region29: #{tpu_custom_call.1} parent=5 // pred_check
        %p202 = pneg %p201
      $region30: #{tpu_custom_call.1} parent=5 // pred_check_branch
        %204 = sbr.rel (%p202) target = $region32
      $region31: #{tpu_custom_call.1} parent=5 // pred_region
        // Predicated region
        $region33: #{tpu_custom_call.1} parent=31 // pred_check
          %p205 = pneg %p38
        $region34: #{tpu_custom_call.1} parent=31 // pred_check_branch
          %207 = sbr.rel (%p205) target = $region36
        $region35: #{tpu_custom_call.1} parent=31 // pred_region
          %s208 = sand.u32 %s28, 1
          %s209 = scalar_lea.sflag [#allocation3], %s208
          %s210 = sand.u32 %s28, 1
          %s211 = smul.addr %s210, 64
          %s212 = scalar_lea.vmem [#allocation2], %s211
          %s213 = smul.u32 8, %s18
          %s214 = ssub.s32 25, %s213
          %p215 = scmp.lt.s32.totalorder %s214, 8
          %s216 = scalar_select %p215, %s214, 8
          %s217 = smul.u32 128, %s216
          %s219 = ssub.s32 1024, %s217
          %220 = vsyncadd %s209, %s219
          %p221 = scmp.ne.s32.totalorder 0, %s217
          %s222 = smul.addr %s213, 128
          %s223 = scalar_lea.hbm %s0, %s222
          %s224 = smul.u32 8, %s216
          %s225 = sshll.u32 %s212, 4
          %s226 = int_to_ptr.vmem [resolvable:$true] %s225
          %s227 = sshll.u32 %s224, 4
          %231 = dma.hbm_to_vmem [thread:$0]  (%p221), %s223, %s227, %s226, %s209, 128, 128, 8
        $region36: #{tpu_custom_call.1} parent=31 // pred_fallthru
          _
      $region32: #{tpu_custom_call.1} parent=5 // pred_fallthru
        _
      %p232 = scmp.le.s32.totalorder 1, %s18
      %p233 = scmp.lt.s32.totalorder %s18, 5
      %p234 = pnand %p232, %p233
      %p235 = pneg %p234
      // Predicated region
      $region37: #{tpu_custom_call.1} parent=5 // pred_check
        _
      $region38: #{tpu_custom_call.1} parent=5 // pred_check_branch
        %237 = sbr.rel (%p234) target = $region40
      $region39: #{tpu_custom_call.1} parent=5 // pred_region
        %s238 = ssub.s32 %s18, 1
        %s239 = sand.u32 %s31, 1
        %s240 = scalar_lea.sflag [#allocation3], %s239
        %s241 = sand.u32 %s31, 1
        %s242 = smul.addr %s241, 64
        %s243 = scalar_lea.vmem [#allocation2], %s242
        // Predicated region
        $region41: #{tpu_custom_call.1} parent=39 // pred_check
          %p244 = pneg %p44
        $region42: #{tpu_custom_call.1} parent=39 // pred_check_branch
          %246 = sbr.rel (%p244) target = $region44
        $region43: #{tpu_custom_call.1} parent=39 // pred_region
          %247 = dma.done %s240, 1024
        $region44: #{tpu_custom_call.1} parent=39 // pred_fallthru
          _
        // Predicated region
        $region45: #{tpu_custom_call.1} parent=39 // pred_check
          %p248 = pneg %p65
        $region46: #{tpu_custom_call.1} parent=39 // pred_check_branch
          %250 = sbr.rel (%p248) target = $region48
        $region47: #{tpu_custom_call.1} parent=39 // pred_region
          %251 = dma.done [#allocation6], 2048
        $region48: #{tpu_custom_call.1} parent=39 // pred_fallthru
          _
        // Predicated region
        $region49: #{tpu_custom_call.1} parent=39 // pred_check
          %p252 = pneg %p107
        $region50: #{tpu_custom_call.1} parent=39 // pred_check_branch
          %254 = sbr.rel (%p252) target = $region52
        $region51: #{tpu_custom_call.1} parent=39 // pred_region
          %255 = dma.done [#allocation6], 2048
        $region52: #{tpu_custom_call.1} parent=39 // pred_fallthru
          _
        %s256 = sand.u32 %s31, 1
        %s257 = scalar_lea.sflag [#allocation3], %s256
        %s258 = sand.u32 %s31, 1
        %s259 = smul.addr %s258, 64
        %s260 = scalar_lea.vmem [#allocation2], %s259
        %p261 = pneg %p44
        %p262 = pneg %p41
        %p263 = pneg %p65
        %p264 = pneg %p62
        %p265 = pneg %p86
        %p266 = pneg %p83
        %p267 = pneg %p107
        %p268 = pneg %p104
        %p269 = pneg %p128
        %p270 = pneg %p125
        %p271 = pneg %p154
        %p272 = pneg %p151
        %s273 = sand.u32 %s141, 1
        %s274 = scalar_lea.sflag [#allocation4], %s273
        %s275 = sand.u32 %s141, 1
        %s276 = smul.addr %s275, 64
        %s277 = scalar_lea.vmem [#allocation8], %s276
        %s278 = smul.u32 8, %s23
        %s279 = ssub.s32 25, %s278
        %p280 = scmp.lt.s32.totalorder %s279, 8
        %s281 = scalar_select %p280, %s279, 8
        %s282 = smul.u32 128, %s281
        %s283 = smul.u32 8, %s23
        %s284 = ssub.s32 25, %s283
        %p285 = scmp.lt.s32.totalorder %s284, 8
        %s286 = scalar_select %p285, %s284, 8
        %s287 = smul.u32 128, %s286
        %v289 = vld [vmem:[%s243] sm:$0xff]
        %v290 = vld [vmem:[%s243 + $0x8] sm:$0xff]
        %v291 = vld [vmem:[%s243 + $0x10] sm:$0xff]
        %v292 = vld [vmem:[%s243 + $0x18] sm:$0xff]
        %v293 = vld [vmem:[%s243 + $0x20] sm:$0xff]
        %v294 = vld [vmem:[%s243 + $0x28] sm:$0xff]
        %v295 = vld [vmem:[%s243 + $0x30] sm:$0xff]
        %v296 = vld [vmem:[%s243 + $0x38] sm:$0xff]
        %v297 = vpack.c.bf16 %v290, %v289
        %v298 = vpack.c.bf16 %v292, %v291
        %v299 = vpack.c.bf16 %v294, %v293
        %v300 = vpack.c.bf16 %v296, %v295
        %v301 = vld [vmem:[#allocation5] sm:$0xff]
        %v302 = vld [vmem:[#allocation5 + $0x8] sm:$0xff]
        %v303 = vld [vmem:[#allocation5 + $0x10] sm:$0xff]
        %v304 = vld [vmem:[#allocation5 + $0x18] sm:$0xff]
        %v305 = vld [vmem:[#allocation5 + $0x20] sm:$0xff]
        %v306 = vld [vmem:[#allocation5 + $0x28] sm:$0xff]
        %v307 = vld [vmem:[#allocation5 + $0x30] sm:$0xff]
        %v308 = vld [vmem:[#allocation5 + $0x38] sm:$0xff]
        %v309 = vld [vmem:[#allocation5 + $0x40] sm:$0xff]
        %v310 = vld [vmem:[#allocation5 + $0x48] sm:$0xff]
        %v311 = vld [vmem:[#allocation5 + $0x50] sm:$0xff]
        %v312 = vld [vmem:[#allocation5 + $0x58] sm:$0xff]
        %v313 = vld [vmem:[#allocation5 + $0x60] sm:$0xff]
        %v314 = vld [vmem:[#allocation5 + $0x68] sm:$0xff]
        %v315 = vld [vmem:[#allocation5 + $0x70] sm:$0xff]
        %v316 = vld [vmem:[#allocation5 + $0x78] sm:$0xff]
        %v317 = vld [vmem:[%s2] sm:$0x3]
        %v319 = vlaneseq
        %v320 = vshrl.u32 %v319, 7
        %v321 = vsub.s32 0, %v320
        %v322 = vrot.slane %v317, %v321
        %v323 = vlaneseq
        %v324 = vshrl.u32 %v323, 7
        %v325 = vsub.s32 1, %v324
        %v326 = vrot.slane %v317, %v325
        %v345 = vunpack.c.l.b16 %v301
        %v346 = vunpack.c.h.b16 %v301
        %v347 = vunpack.c.l.b16 %v302
        %v348 = vunpack.c.h.b16 %v302
        %v349 = vunpack.c.l.b16 %v303
        %v350 = vunpack.c.h.b16 %v303
        %v351 = vunpack.c.l.b16 %v304
        %v352 = vunpack.c.h.b16 %v304
        %v353 = vunpack.c.l.b16 %v305
        %v354 = vunpack.c.h.b16 %v305
        %v355 = vunpack.c.l.b16 %v306
        %v356 = vunpack.c.h.b16 %v306
        %v357 = vunpack.c.l.b16 %v307
        %v358 = vunpack.c.h.b16 %v307
        %v359 = vunpack.c.l.b16 %v308
        %v360 = vunpack.c.h.b16 %v308
        %v361 = vunpack.c.l.b16 %v309
        %v362 = vunpack.c.h.b16 %v309
        %v363 = vunpack.c.l.b16 %v310
        %v364 = vunpack.c.h.b16 %v310
        %v365 = vunpack.c.l.b16 %v311
        %v366 = vunpack.c.h.b16 %v311
        %v367 = vunpack.c.l.b16 %v312
        %v368 = vunpack.c.h.b16 %v312
        %v369 = vunpack.c.l.b16 %v313
        %v370 = vunpack.c.h.b16 %v313
        %v371 = vunpack.c.l.b16 %v314
        %v372 = vunpack.c.h.b16 %v314
        %v373 = vunpack.c.l.b16 %v315
        %v374 = vunpack.c.h.b16 %v315
        %v375 = vunpack.c.l.b16 %v316
        %v376 = vunpack.c.h.b16 %v316
        %v377 = vpack.c.b16 %v347, %v345
        %v378 = vpack.c.b16 %v348, %v346
        %v379 = vpack.c.b16 %v351, %v349
        %v380 = vpack.c.b16 %v352, %v350
        %v381 = vpack.c.b16 %v355, %v353
        %v382 = vpack.c.b16 %v356, %v354
        %v383 = vpack.c.b16 %v359, %v357
        %v384 = vpack.c.b16 %v360, %v358
        %v385 = vpack.c.b16 %v363, %v361
        %v386 = vpack.c.b16 %v364, %v362
        %v387 = vpack.c.b16 %v367, %v365
        %v388 = vpack.c.b16 %v368, %v366
        %v389 = vpack.c.b16 %v371, %v369
        %v390 = vpack.c.b16 %v372, %v370
        %v391 = vpack.c.b16 %v375, %v373
        %v392 = vpack.c.b16 %v376, %v374
        %409 = vmatprep.subr.bf16.mxu0 %v378
        %410 = vmatpush1.bf16.msra.mxu0 %v377
        %411 = vmatprep.subr.bf16.mxu0 %v380
        %412 = vmatpush1.bf16.msra.mxu0 %v379
        %413 = vmatprep.subr.bf16.mxu0 %v382
        %414 = vmatpush1.bf16.msra.mxu0 %v381
        %415 = vmatprep.subr.bf16.mxu0 %v384
        %416 = vmatpush1.bf16.msra.mxu0 %v383
        %417 = vmatprep.subr.bf16.mxu0 %v386
        %418 = vmatpush1.bf16.msra.mxu0 %v385
        %419 = vmatprep.subr.bf16.mxu0 %v388
        %420 = vmatpush1.bf16.msra.mxu0 %v387
        %421 = vmatprep.subr.bf16.mxu0 %v390
        %422 = vmatpush1.bf16.msra.mxu0 %v389
        %423 = vmatprep.subr.bf16.mxu0 %v392
        %424 = vmatpush1.bf16.msra.mxu0 %v391
        %425 = vmatprep.subr.bf16.mxu0 0
        %426 = vmatpush1.bf16.msra.mxu0 0
        %427 = vmatprep.subr.bf16.mxu0 0
        %428 = vmatpush1.bf16.msra.mxu0 0
        %429 = vmatprep.subr.bf16.mxu0 0
        %430 = vmatpush1.bf16.msra.mxu0 0
        %431 = vmatprep.subr.bf16.mxu0 0
        %432 = vmatpush1.bf16.msra.mxu0 0
        %433 = vmatprep.subr.bf16.mxu0 0
        %434 = vmatpush1.bf16.msra.mxu0 0
        %435 = vmatprep.subr.bf16.mxu0 0
        %436 = vmatpush1.bf16.msra.mxu0 0
        %437 = vmatprep.subr.bf16.mxu0 0
        %438 = vmatpush1.bf16.msra.mxu0 0
        %439 = vmatprep.subr.bf16.mxu0 0
        %440 = vmatpush1.bf16.msra.mxu0 0
        %441 = vmatprep.mubr.bf16.mxu0 0
        %442 = vmatmul.mubr.bf16.gmra.mrb[0].mxu0 %v297
        %v443 = vpop.f32.mrb[0].mxu0
        %v444 = vadd.f32 %v322, %v443
        %v445 = vpop.f32.mrb[0].mxu0
        %v446 = vadd.f32 %v326, %v445
        %v447 = vpop.f32.mrb[0].mxu0
        %v448 = vadd.f32 %v322, %v447
        %v449 = vpop.f32.mrb[0].mxu0
        %v450 = vadd.f32 %v326, %v449
        %451 = vmatprep.mubr.bf16.mxu0 0
        %452 = vmatmul.mubr.bf16.gmra.mrb[0].mxu0 %v298
        %v453 = vpop.f32.mrb[0].mxu0
        %v454 = vadd.f32 %v322, %v453
        %v455 = vpop.f32.mrb[0].mxu0
        %v456 = vadd.f32 %v326, %v455
        %v457 = vpop.f32.mrb[0].mxu0
        %v458 = vadd.f32 %v322, %v457
        %v459 = vpop.f32.mrb[0].mxu0
        %v460 = vadd.f32 %v326, %v459
        %461 = vmatprep.mubr.bf16.mxu0 0
        %462 = vmatmul.mubr.bf16.gmra.mrb[0].mxu0 %v299
        %v463 = vpop.f32.mrb[0].mxu0
        %v464 = vadd.f32 %v322, %v463
        %v465 = vpop.f32.mrb[0].mxu0
        %v466 = vadd.f32 %v326, %v465
        %v467 = vpop.f32.mrb[0].mxu0
        %v468 = vadd.f32 %v322, %v467
        %v469 = vpop.f32.mrb[0].mxu0
        %v470 = vadd.f32 %v326, %v469
        %471 = vmatprep.mubr.bf16.mxu0 0
        %472 = vmatmul.mubr.bf16.gmra.mrb[0].mxu0 %v300
        %v473 = vpop.f32.mrb[0].mxu0
        %v474 = vadd.f32 %v322, %v473
        %v475 = vpop.f32.mrb[0].mxu0
        %v476 = vadd.f32 %v326, %v475
        %v477 = vpop.f32.mrb[0].mxu0
        %v478 = vadd.f32 %v322, %v477
        %v479 = vpop.f32.mrb[0].mxu0
        %v480 = vadd.f32 %v326, %v479
        %481 = vdwg.mxu0
        %v482 = vand.u32 2147483647, %v444
        %v483 = vand.u32 2147483647, %v446
        %v484 = vand.u32 2147483647, %v448
        %v485 = vand.u32 2147483647, %v450
        %v486 = vand.u32 2147483647, %v454
        %v487 = vand.u32 2147483647, %v456
        %v488 = vand.u32 2147483647, %v458
        %v489 = vand.u32 2147483647, %v460
        %v490 = vand.u32 2147483647, %v464
        %v491 = vand.u32 2147483647, %v466
        %v492 = vand.u32 2147483647, %v468
        %v493 = vand.u32 2147483647, %v470
        %v494 = vand.u32 2147483647, %v474
        %v495 = vand.u32 2147483647, %v476
        %v496 = vand.u32 2147483647, %v478
        %v497 = vand.u32 2147483647, %v480
        %v498 = vmul.f32 %v482, 2.0
        %v499 = vmul.f32 %v483, 2.0
        %v500 = vmul.f32 %v484, 2.0
        %v501 = vmul.f32 %v485, 2.0
        %v502 = vmul.f32 %v486, 2.0
        %v503 = vmul.f32 %v487, 2.0
        %v504 = vmul.f32 %v488, 2.0
        %v505 = vmul.f32 %v489, 2.0
        %v506 = vmul.f32 %v490, 2.0
        %v507 = vmul.f32 %v491, 2.0
        %v508 = vmul.f32 %v492, 2.0
        %v509 = vmul.f32 %v493, 2.0
        %v510 = vmul.f32 %v494, 2.0
        %v511 = vmul.f32 %v495, 2.0
        %v512 = vmul.f32 %v496, 2.0
        %v513 = vmul.f32 %v497, 2.0
        %v514 = vadd.f32 %v498, 1.0
        %v515 = vadd.f32 %v499, 1.0
        %v516 = vadd.f32 %v500, 1.0
        %v517 = vadd.f32 %v501, 1.0
        %v518 = vadd.f32 %v502, 1.0
        %v519 = vadd.f32 %v503, 1.0
        %v520 = vadd.f32 %v504, 1.0
        %v521 = vadd.f32 %v505, 1.0
        %v522 = vadd.f32 %v506, 1.0
        %v523 = vadd.f32 %v507, 1.0
        %v524 = vadd.f32 %v508, 1.0
        %v525 = vadd.f32 %v509, 1.0
        %v526 = vadd.f32 %v510, 1.0
        %v527 = vadd.f32 %v511, 1.0
        %v528 = vadd.f32 %v512, 1.0
        %v529 = vadd.f32 %v513, 1.0
        %v530 = vrcp.pop %v514
        %v531 = vrcp.pop %v515
        %v532 = vrcp.pop %v516
        %v533 = vrcp.pop %v517
        %v534 = vrcp.pop %v518
        %v535 = vrcp.pop %v519
        %v536 = vrcp.pop %v520
        %v537 = vrcp.pop %v521
        %v538 = vrcp.pop %v522
        %v539 = vrcp.pop %v523
        %v540 = vrcp.pop %v524
        %v541 = vrcp.pop %v525
        %v542 = vrcp.pop %v526
        %v543 = vrcp.pop %v527
        %v544 = vrcp.pop %v528
        %v545 = vrcp.pop %v529
        %v546 = vmul.f32 %v444, %v530
        %v547 = vmul.f32 %v446, %v531
        %v548 = vmul.f32 %v448, %v532
        %v549 = vmul.f32 %v450, %v533
        %v550 = vmul.f32 %v454, %v534
        %v551 = vmul.f32 %v456, %v535
        %v552 = vmul.f32 %v458, %v536
        %v553 = vmul.f32 %v460, %v537
        %v554 = vmul.f32 %v464, %v538
        %v555 = vmul.f32 %v466, %v539
        %v556 = vmul.f32 %v468, %v540
        %v557 = vmul.f32 %v470, %v541
        %v558 = vmul.f32 %v474, %v542
        %v559 = vmul.f32 %v476, %v543
        %v560 = vmul.f32 %v478, %v544
        %v561 = vmul.f32 %v480, %v545
        %v562 = vpack.c.bf16 %v548, %v546
        %v563 = vpack.c.bf16 %v549, %v547
        %v564 = vpack.c.bf16 %v552, %v550
        %v565 = vpack.c.bf16 %v553, %v551
        %v566 = vpack.c.bf16 %v556, %v554
        %v567 = vpack.c.bf16 %v557, %v555
        %v568 = vpack.c.bf16 %v560, %v558
        %v569 = vpack.c.bf16 %v561, %v559
        %v570 = vld [vmem:[#allocation7] sm:$0xf]
        %v571 = vld [vmem:[#allocation7 + $0x4] sm:$0xf]
        %v572 = vld [vmem:[#allocation7 + $0x8] sm:$0xf]
        %v573 = vld [vmem:[#allocation7 + $0xc] sm:$0xf]
        %v574 = vld [vmem:[#allocation7 + $0x10] sm:$0xf]
        %v575 = vld [vmem:[#allocation7 + $0x14] sm:$0xf]
        %v576 = vld [vmem:[#allocation7 + $0x18] sm:$0xf]
        %v577 = vld [vmem:[#allocation7 + $0x1c] sm:$0xf]
        %v578 = vld [vmem:[#allocation7 + $0x20] sm:$0xf]
        %v579 = vld [vmem:[#allocation7 + $0x24] sm:$0xf]
        %v580 = vld [vmem:[#allocation7 + $0x28] sm:$0xf]
        %v581 = vld [vmem:[#allocation7 + $0x2c] sm:$0xf]
        %v582 = vld [vmem:[#allocation7 + $0x30] sm:$0xf]
        %v583 = vld [vmem:[#allocation7 + $0x34] sm:$0xf]
        %v584 = vld [vmem:[#allocation7 + $0x38] sm:$0xf]
        %v585 = vld [vmem:[#allocation7 + $0x3c] sm:$0xf]
        %v586 = vld [vmem:[#allocation7 + $0x40] sm:$0xf]
        %v587 = vld [vmem:[#allocation7 + $0x44] sm:$0xf]
        %v588 = vld [vmem:[#allocation7 + $0x48] sm:$0xf]
        %v589 = vld [vmem:[#allocation7 + $0x4c] sm:$0xf]
        %v590 = vld [vmem:[#allocation7 + $0x50] sm:$0xf]
        %v591 = vld [vmem:[#allocation7 + $0x54] sm:$0xf]
        %v592 = vld [vmem:[#allocation7 + $0x58] sm:$0xf]
        %v593 = vld [vmem:[#allocation7 + $0x5c] sm:$0xf]
        %v594 = vld [vmem:[#allocation7 + $0x60] sm:$0xf]
        %v595 = vld [vmem:[#allocation7 + $0x64] sm:$0xf]
        %v596 = vld [vmem:[#allocation7 + $0x68] sm:$0xf]
        %v597 = vld [vmem:[#allocation7 + $0x6c] sm:$0xf]
        %v598 = vld [vmem:[#allocation7 + $0x70] sm:$0xf]
        %v599 = vld [vmem:[#allocation7 + $0x74] sm:$0xf]
        %v600 = vld [vmem:[#allocation7 + $0x78] sm:$0xf]
        %v601 = vld [vmem:[#allocation7 + $0x7c] sm:$0xf]
        %v602 = vld [vmem:[%s4] sm:$0x1]
        %v604 = vlaneseq
        %v605 = vshrl.u32 %v604, 7
        %v606 = vsub.s32 0, %v605
        %v607 = vrot.slane %v602, %v606
        %v641 = vunpack.c.l.b16 %v570
        %v642 = vunpack.c.l.b16 %v571
        %v643 = vunpack.c.l.b16 %v572
        %v644 = vunpack.c.l.b16 %v573
        %v645 = vunpack.c.l.b16 %v574
        %v646 = vunpack.c.l.b16 %v575
        %v647 = vunpack.c.l.b16 %v576
        %v648 = vunpack.c.l.b16 %v577
        %v649 = vunpack.c.l.b16 %v578
        %v650 = vunpack.c.l.b16 %v579
        %v651 = vunpack.c.l.b16 %v580
        %v652 = vunpack.c.l.b16 %v581
        %v653 = vunpack.c.l.b16 %v582
        %v654 = vunpack.c.l.b16 %v583
        %v655 = vunpack.c.l.b16 %v584
        %v656 = vunpack.c.l.b16 %v585
        %v657 = vunpack.c.l.b16 %v586
        %v658 = vunpack.c.l.b16 %v587
        %v659 = vunpack.c.l.b16 %v588
        %v660 = vunpack.c.l.b16 %v589
        %v661 = vunpack.c.l.b16 %v590
        %v662 = vunpack.c.l.b16 %v591
        %v663 = vunpack.c.l.b16 %v592
        %v664 = vunpack.c.l.b16 %v593
        %v665 = vunpack.c.l.b16 %v594
        %v666 = vunpack.c.l.b16 %v595
        %v667 = vunpack.c.l.b16 %v596
        %v668 = vunpack.c.l.b16 %v597
        %v669 = vunpack.c.l.b16 %v598
        %v670 = vunpack.c.l.b16 %v599
        %v671 = vunpack.c.l.b16 %v600
        %v672 = vunpack.c.l.b16 %v601
        %v673 = vpack.c.b16 %v642, %v641
        %v674 = vpack.c.b16 %v644, %v643
        %v675 = vpack.c.b16 %v646, %v645
        %v676 = vpack.c.b16 %v648, %v647
        %v677 = vpack.c.b16 %v650, %v649
        %v678 = vpack.c.b16 %v652, %v651
        %v679 = vpack.c.b16 %v654, %v653
        %v680 = vpack.c.b16 %v656, %v655
        %v681 = vpack.c.b16 %v658, %v657
        %v682 = vpack.c.b16 %v660, %v659
        %v683 = vpack.c.b16 %v662, %v661
        %v684 = vpack.c.b16 %v664, %v663
        %v685 = vpack.c.b16 %v666, %v665
        %v686 = vpack.c.b16 %v668, %v667
        %v687 = vpack.c.b16 %v670, %v669
        %v688 = vpack.c.b16 %v672, %v671
        %705 = vmatprep.subr.bf16.mxu0 0
        %706 = vmatpush1.bf16.msra.mxu0 %v673
        %707 = vmatprep.subr.bf16.mxu0 0
        %708 = vmatpush1.bf16.msra.mxu0 %v674
        %709 = vmatprep.subr.bf16.mxu0 0
        %710 = vmatpush1.bf16.msra.mxu0 %v675
        %711 = vmatprep.subr.bf16.mxu0 0
        %712 = vmatpush1.bf16.msra.mxu0 %v676
        %713 = vmatprep.subr.bf16.mxu0 0
        %714 = vmatpush1.bf16.msra.mxu0 %v677
        %715 = vmatprep.subr.bf16.mxu0 0
        %716 = vmatpush1.bf16.msra.mxu0 %v678
        %717 = vmatprep.subr.bf16.mxu0 0
        %718 = vmatpush1.bf16.msra.mxu0 %v679
        %719 = vmatprep.subr.bf16.mxu0 0
        %720 = vmatpush1.bf16.msra.mxu0 %v680
        %721 = vmatprep.subr.bf16.mxu0 0
        %722 = vmatpush1.bf16.msra.mxu0 %v681
        %723 = vmatprep.subr.bf16.mxu0 0
        %724 = vmatpush1.bf16.msra.mxu0 %v682
        %725 = vmatprep.subr.bf16.mxu0 0
        %726 = vmatpush1.bf16.msra.mxu0 %v683
        %727 = vmatprep.subr.bf16.mxu0 0
        %728 = vmatpush1.bf16.msra.mxu0 %v684
        %729 = vmatprep.subr.bf16.mxu0 0
        %730 = vmatpush1.bf16.msra.mxu0 %v685
        %731 = vmatprep.subr.bf16.mxu0 0
        %732 = vmatpush1.bf16.msra.mxu0 %v686
        %733 = vmatprep.subr.bf16.mxu0 0
        %734 = vmatpush1.bf16.msra.mxu0 %v687
        %735 = vmatprep.subr.bf16.mxu0 0
        %736 = vmatpush1.bf16.msra.mxu0 %v688
        %737 = vmatprep.mubr.bf16.mxu0 %v563
        %738 = vmatmul.mubr.bf16.gmra.mrb[0].mxu0 %v562
        %v739 = vpop.f32.mrb[0].mxu0
        %v740 = vadd.f32 %v607, %v739
        %v741 = vpop.f32.mrb[0].mxu0
        %v742 = vpop.f32.mrb[0].mxu0
        %v743 = vadd.f32 %v607, %v742
        %v744 = vpop.f32.mrb[0].mxu0
        %745 = vmatprep.mubr.bf16.mxu0 %v565
        %746 = vmatmul.mubr.bf16.gmra.mrb[0].mxu0 %v564
        %v747 = vpop.f32.mrb[0].mxu0
        %v748 = vadd.f32 %v607, %v747
        %v749 = vpop.f32.mrb[0].mxu0
        %v750 = vpop.f32.mrb[0].mxu0
        %v751 = vadd.f32 %v607, %v750
        %v752 = vpop.f32.mrb[0].mxu0
        %753 = vmatprep.mubr.bf16.mxu0 %v567
        %754 = vmatmul.mubr.bf16.gmra.mrb[0].mxu0 %v566
        %v755 = vpop.f32.mrb[0].mxu0
        %v756 = vadd.f32 %v607, %v755
        %v757 = vpop.f32.mrb[0].mxu0
        %v758 = vpop.f32.mrb[0].mxu0
        %v759 = vadd.f32 %v607, %v758
        %v760 = vpop.f32.mrb[0].mxu0
        %761 = vmatprep.mubr.bf16.mxu0 %v569
        %762 = vmatmul.mubr.bf16.gmra.mrb[0].mxu0 %v568
        %v763 = vpop.f32.mrb[0].mxu0
        %v764 = vadd.f32 %v607, %v763
        %v765 = vpop.f32.mrb[0].mxu0
        %v766 = vpop.f32.mrb[0].mxu0
        %v767 = vadd.f32 %v607, %v766
        %v768 = vpop.f32.mrb[0].mxu0
        %769 = vdwg.mxu0
        %v770 = vand.u32 2147483647, %v740
        %v771 = vand.u32 2147483647, %v743
        %v772 = vand.u32 2147483647, %v748
        %v773 = vand.u32 2147483647, %v751
        %v774 = vand.u32 2147483647, %v756
        %v775 = vand.u32 2147483647, %v759
        %v776 = vand.u32 2147483647, %v764
        %v777 = vand.u32 2147483647, %v767
        %v778 = vadd.f32 %v770, 1.0
        %v779 = vadd.f32 %v771, 1.0
        %v780 = vadd.f32 %v772, 1.0
        %v781 = vadd.f32 %v773, 1.0
        %v782 = vadd.f32 %v774, 1.0
        %v783 = vadd.f32 %v775, 1.0
        %v784 = vadd.f32 %v776, 1.0
        %v785 = vadd.f32 %v777, 1.0
        %v786 = vrcp.pop %v778
        %v787 = vrcp.pop %v779
        %v788 = vrcp.pop %v780
        %v789 = vrcp.pop %v781
        %v790 = vrcp.pop %v782
        %v791 = vrcp.pop %v783
        %v792 = vrcp.pop %v784
        %v793 = vrcp.pop %v785
        %v794 = vmul.f32 %v740, %v786
        %v795 = vmul.f32 %v743, %v787
        %v796 = vmul.f32 %v748, %v788
        %v797 = vmul.f32 %v751, %v789
        %v798 = vmul.f32 %v756, %v790
        %v799 = vmul.f32 %v759, %v791
        %v800 = vmul.f32 %v764, %v792
        %v801 = vmul.f32 %v767, %v793
        %802 = vst [vmem:[%s277] sm:$0xff] %v794
        %803 = vst [vmem:[%s277 + $0x8] sm:$0xff] %v795
        %804 = vst [vmem:[%s277 + $0x10] sm:$0xff] %v796
        %805 = vst [vmem:[%s277 + $0x18] sm:$0xff] %v797
        %806 = vst [vmem:[%s277 + $0x20] sm:$0xff] %v798
        %807 = vst [vmem:[%s277 + $0x28] sm:$0xff] %v799
        %808 = vst [vmem:[%s277 + $0x30] sm:$0xff] %v800
        %809 = vst [vmem:[%s277 + $0x38] sm:$0xff] %v801
        %s810 = sand.u32 %s141, 1
        %s811 = scalar_lea.sflag [#allocation4], %s810
        %s812 = sand.u32 %s141, 1
        %s813 = smul.addr %s812, 64
        %s814 = scalar_lea.vmem [#allocation8], %s813
        // Predicated region
        $region53: #{tpu_custom_call.1} parent=39 // pred_check
          %p815 = pneg %p151
        $region54: #{tpu_custom_call.1} parent=39 // pred_check_branch
          %817 = sbr.rel (%p815) target = $region56
        $region55: #{tpu_custom_call.1} parent=39 // pred_region
          %s818 = smul.u32 8, %s23
          %s819 = ssub.s32 25, %s818
          %p820 = scmp.lt.s32.totalorder %s819, 8
          %s821 = scalar_select %p820, %s819, 8
          %s822 = smul.u32 128, %s821
          %s824 = ssub.s32 1024, %s822
          %825 = vsyncadd %s811, %s824
          %p826 = scmp.ne.s32.totalorder 0, %s822
          %s827 = smul.addr %s818, 128
          %s828 = scalar_lea.hbm %s5, %s827
          %s829 = smul.u32 8, %s821
          %s830 = sshll.u32 %s814, 4
          %s831 = int_to_ptr.vmem [resolvable:$true] %s830
          %s832 = sshll.u32 %s829, 4
          %836 = dma.vmem_to_hbm [thread:$0]  (%p826), %s831, %s832, %s828, %s811, 128, 128, 8
        $region56: #{tpu_custom_call.1} parent=39 // pred_fallthru
          _
      $region40: #{tpu_custom_call.1} parent=5 // pred_fallthru
        _
      %p837 = scmp.le.s32.totalorder 2, %s18
      // Predicated region
      $region57: #{tpu_custom_call.1} parent=5 // pred_check
        %p838 = pneg %p837
      $region58: #{tpu_custom_call.1} parent=5 // pred_check_branch
        %840 = sbr.rel (%p838) target = $region60
      $region59: #{tpu_custom_call.1} parent=5 // pred_region
        %s841 = ssub.s32 %s18, 2
        // Predicated region
        $region61: #{tpu_custom_call.1} parent=59 // pred_check
          %p842 = pneg %p157
        $region62: #{tpu_custom_call.1} parent=59 // pred_check_branch
          %844 = sbr.rel (%p842) target = $region64
        $region63: #{tpu_custom_call.1} parent=59 // pred_region
          %s845 = sand.u32 %s142, 1
          %s846 = scalar_lea.sflag [#allocation4], %s845
          %s847 = sand.u32 %s142, 1
          %s848 = smul.addr %s847, 64
          %s849 = scalar_lea.vmem [#allocation8], %s848
          %850 = dma.done %s846, 1024
        $region64: #{tpu_custom_call.1} parent=59 // pred_fallthru
          _
      $region60: #{tpu_custom_call.1} parent=5 // pred_fallthru
        _
    $region6: #{tpu_custom_call.1} parent=1 // loop_footer
      %s22 = sadd.s32 1, %s18
    $region7: #{tpu_custom_call.1} parent=1 // loop_footer_branch
      %17 = sbr.rel target = $region3
    $region8: #{tpu_custom_call.1} parent=1 // loop_exit
      _
    %851 = vsyncpa [#allocation3], 1
    %s852 = scalar_lea.sflag [#allocation3], 1
    %853 = vsyncpa %s852, 1
    %854 = vsyncpa [#allocation6], 1
    %855 = vsyncpa [#allocation4], 1
    %s856 = scalar_lea.sflag [#allocation4], 1
    %857 = vsyncpa %s856, 1

</llo_original>
